<compile_context>
chip_gen: v5e
topology: v5e:2x2
jax: 0.10.0
libtpu: 0.0.40
codegen_flags: <defaults>
</compile_context>

<pallas_src>
import functools

import jax
import jax.numpy as jnp
from jax import lax
from jax.experimental import pallas as pl
from jax.experimental.pallas import tpu as pltpu


# ---------------------------------------------------------------------------
# Kernel
# ---------------------------------------------------------------------------
def mlp_kernel(x_ref, w1_ref, b1_ref, w2_ref, b2_ref, w3t_ref, b3_ref, o_ref):
    # x arrives f32 from HBM; cast in-kernel so the HBM copy stays f32.
    x = x_ref[...].astype(jnp.bfloat16)

    # layer1: Linear + ReLU   (bf16 operands, f32 MXU accumulation)
    h1 = jnp.dot(x, w1_ref[...], preferred_element_type=jnp.float32)
    h1 = jnp.maximum(h1 + b1_ref[...], 0.0)
    # dropout(p=0.2) -> identity in eval mode
    # (training-mode dropout would use pltpu.prng_seed + pltpu.prng_random_bits)

    # layer2: Linear + ReLU
    h2 = jnp.dot(h1.astype(jnp.bfloat16), w2_ref[...],
                 preferred_element_type=jnp.float32)
    h2 = jnp.maximum(h2 + b2_ref[...], 0.0)
    # dropout(p=0.2) -> identity in eval mode

    # layer3 (no activation), computed transposed so the result is already
    # lane-dense along the batch axis:
    #   (O_pad, H_pad) contracted with (tile, H_pad) on H_pad -> (O_pad, tile)
    out_t = lax.dot_general(
        w3t_ref[...], h2.astype(jnp.bfloat16),
        dimension_numbers=(((1,), (1,)), ((), ())),
        preferred_element_type=jnp.float32,
    )
    o_ref[...] = (out_t + b3_ref[...]).astype(o_ref.dtype)


# ---------------------------------------------------------------------------
# Wrapper
# ---------------------------------------------------------------------------
def _round_up(n, m):
    return (n + m - 1) // m * m


def _pad_and_cast_params(params, hp, orows):
    """Zero-pad hidden dim to hp and output-channel dim to orows.

    Zero padding is exact: padded h1/h2 columns are relu(0+0)=0 and the
    matching padded weight rows/cols are zero, so padded lanes never
    contribute.  Layer-3 weights are stored transposed (rows = out channels).
    """
    w1, b1 = params["w1"], params["b1"]
    w2, b2 = params["w2"], params["b2"]
    w3, b3 = params["w3"], params["b3"]
    d, h = w1.shape
    o = w3.shape[1]

    w1p = jnp.zeros((d, hp), jnp.bfloat16).at[:, :h].set(w1.astype(jnp.bfloat16))
    b1p = jnp.zeros((1, hp), jnp.float32).at[:, :h].set(b1.astype(jnp.float32))
    w2p = jnp.zeros((hp, hp), jnp.bfloat16).at[:h, :h].set(w2.astype(jnp.bfloat16))
    b2p = jnp.zeros((1, hp), jnp.float32).at[:, :h].set(b2.astype(jnp.float32))
    w3t = jnp.zeros((orows, hp), jnp.bfloat16).at[:o, :h].set(
        w3.T.astype(jnp.bfloat16))
    b3p = jnp.zeros((orows, 1), jnp.float32).at[:o, :].set(b3.T.astype(jnp.float32))
    return w1p, b1p, w2p, b2p, w3t, b3p


def _vmem_budget_bytes(bt, d, hp, orows):
    f32, bf16 = 4, 2
    x_tile = 2 * bt * d * f32                  # double-buffered input tile
    out_tile = 2 * orows * bt * f32            # double-buffered output tile
    weights = 2 * (d * hp + hp * hp + orows * hp) * bf16
    biases = 2 * (2 * hp + orows) * f32
    interm = 3 * bt * hp * f32                 # f32 h1/h2 temporaries + slack
    total = int((x_tile + out_tile + weights + biases + interm) * 2) + (8 << 20)
    return max(16 << 20, min(total, 32 << 20))  # safe on v5e/v6e/v7x scoped VMEM


@functools.partial(jax.jit, static_argnames=("batch_tile",))
def stock_prediction_nn(x, params, *, batch_tile=None):
    """Fused forward pass of StockPredictionNN via one pallas_call.

    x: (B, input_size) float32
    params: dict with w1 (D,H), b1 (1,H), w2 (H,H), b2 (1,H), w3 (H,O), b3 (1,O)
    returns (B, O) float32
    """
    B, D = x.shape
    H = params["w1"].shape[1]
    O = params["w3"].shape[1]
    Hp = _round_up(max(H, 128), 128)   # full-lane hidden dim
    Or = _round_up(max(O, 8), 8)       # sublane-aligned output-channel dim

    w1p, b1p, w2p, b2p, w3t, b3p = _pad_and_cast_params(params, Hp, Or)

    # Batch tiling.  Single tile when B is small; otherwise 128-multiple tiles
    # so the lane-dim blocking of the (Or, Bp) output stays legal and dense.
    if batch_tile is None:
        batch_tile = min(1024, _round_up(B, 8))
    batch_tile = _round_up(batch_tile, 8)
    Bp = _round_up(B, batch_tile)
    if Bp > batch_tile:                       # more than one tile in the grid
        batch_tile = _round_up(batch_tile, 128)
        Bp = _round_up(B, batch_tile)
    if Bp != B:
        x = jnp.pad(x, ((0, Bp - B), (0, 0)))
    grid = (Bp // batch_tile,)

    # Weights/biases are small -> full-array blocks with a constant index map
    # (resident in VMEM, no re-DMA across grid steps).
    full = lambda shape: pl.BlockSpec(shape, lambda i: (0, 0))

    out = pl.pallas_call(
        mlp_kernel,
        out_shape=jax.ShapeDtypeStruct((Or, Bp), jnp.float32),
        grid_spec=pltpu.PrefetchScalarGridSpec(
            num_scalar_prefetch=0,
            grid=grid,
            in_specs=[
                pl.BlockSpec((batch_tile, D), lambda i: (i, 0)),  # x tile
                full((D, Hp)),    # w1
                full((1, Hp)),    # b1
                full((Hp, Hp)),   # w2
                full((1, Hp)),    # b2
                full((Or, Hp)),   # w3 (transposed)
                full((Or, 1)),    # b3 (transposed)
            ],
            out_specs=pl.BlockSpec((Or, batch_tile), lambda i: (0, i)),
        ),
        compiler_params=pltpu.CompilerParams(
            dimension_semantics=("parallel",),
            vmem_limit_bytes=_vmem_budget_bytes(batch_tile, D, Hp, Or),
        ),
    )(x, w1p, b1p, w2p, b2p, w3t, b3p)

    # (Or, Bp) -> strip channel/batch padding, back to PyTorch's (B, O).
    return out[:O, :B].T


# ---------------------------------------------------------------------------
# Init + reference
# ---------------------------------------------------------------------------
def init_params(key, input_size, hidden_size=64, output_size=1):
    """Deterministic init mimicking nn.Linear's U(-1/sqrt(fan_in), 1/sqrt(fan_in))."""
    def linear(k, fan_in, fan_out):
        kw, kb = jax.random.split(k)
        bound = 1.0 / jnp.sqrt(fan_in)
        w = jax.random.uniform(kw, (fan_in, fan_out), jnp.float32, -bound, bound)
        b = jax.random.uniform(kb, (1, fan_out), jnp.float32, -bound, bound)
        return w, b

    k1, k2, k3 = jax.random.split(key, 3)
    w1, b1 = linear(k1, input_size, hidden_size)
    w2, b2 = linear(k2, hidden_size, hidden_size)
    w3, b3 = linear(k3, hidden_size, output_size)
    return {"w1": w1, "b1": b1, "w2": w2, "b2": b2, "w3": w3, "b3": b3}


def reference_forward(x, p):
    h = jnp.maximum(x @ p["w1"] + p["b1"], 0.0)
    h = jnp.maximum(h @ p["w2"] + p["b2"], 0.0)
    return h @ p["w3"] + p["b3"]


# ---------------------------------------------------------------------------
# Demo / correctness check
# ---------------------------------------------------------------------------
if __name__ == "__main__":
    key = jax.random.PRNGKey(0)
    k_params, k_x = jax.random.split(key)

    batch = 8
    input_size = 32
    hidden_size = 64
    output_size = 1

    params = init_params(k_params, input_size, hidden_size, output_size)
    x = jax.random.normal(k_x, (batch, input_size), jnp.float32)

    out = stock_prediction_nn(x, params)
    out = jax.block_until_ready(out)

    ref = reference_forward(x, params)
    assert out.shape == (batch, output_size)
    # bf16 operands with f32 accumulation -> tolerance loosened vs. pure-f32 ref.
    assert jnp.allclose(out, ref, atol=5e-2, rtol=5e-2), "mismatch vs reference"

    print("KERNEL_OK")
</pallas_src>

<mosaic_0001>
module attributes {stable_mosaic.version = 11 : i64} {
  func.func @mlp_kernel(%arg0: i32, %arg1: memref<8x32xf32, #tpu.memory_space<vmem>>, %arg2: memref<32x128xbf16, #tpu.memory_space<vmem>>, %arg3: memref<1x128xf32, #tpu.memory_space<vmem>>, %arg4: memref<128x128xbf16, #tpu.memory_space<vmem>>, %arg5: memref<1x128xf32, #tpu.memory_space<vmem>>, %arg6: memref<8x128xbf16, #tpu.memory_space<vmem>>, %arg7: memref<8x1xf32, #tpu.memory_space<vmem>>, %arg8: memref<8x8xf32, #tpu.memory_space<vmem>>) attributes {dimension_semantics = [#tpu.dimension_semantics<parallel>], iteration_bounds = array<i64: 1>, scalar_prefetch = 0 : i64, scratch_operands = 0 : i64, tpu.core_type = #tpu.core_type<tc>, window_params = [{transform_indices = @transform_0, window_bounds = array<i64: 8, 32>}, {pipeline_mode = #tpu.pipeline_mode<synchronous>, transform_indices = @transform_1, window_bounds = array<i64: 32, 128>}, {pipeline_mode = #tpu.pipeline_mode<synchronous>, transform_indices = @transform_2, window_bounds = array<i64: 1, 128>}, {pipeline_mode = #tpu.pipeline_mode<synchronous>, transform_indices = @transform_3, window_bounds = array<i64: 128, 128>}, {pipeline_mode = #tpu.pipeline_mode<synchronous>, transform_indices = @transform_4, window_bounds = array<i64: 1, 128>}, {pipeline_mode = #tpu.pipeline_mode<synchronous>, transform_indices = @transform_5, window_bounds = array<i64: 8, 128>}, {pipeline_mode = #tpu.pipeline_mode<synchronous>, transform_indices = @transform_6, window_bounds = array<i64: 8, 1>}, {transform_indices = @transform_7, window_bounds = array<i64: 8, 8>}]} {
    %c0 = arith.constant 0 : index
    %c0_0 = arith.constant 0 : index
    %0 = vector.load %arg1[%c0, %c0_0] : memref<8x32xf32, #tpu.memory_space<vmem>>, vector<8x32xf32>
    %1 = arith.truncf %0 : vector<8x32xf32> to vector<8x32xbf16>
    %c0_1 = arith.constant 0 : index
    %c0_2 = arith.constant 0 : index
    %2 = vector.load %arg2[%c0_1, %c0_2] : memref<32x128xbf16, #tpu.memory_space<vmem>>, vector<32x128xbf16>
    %cst = arith.constant dense<0.000000e+00> : vector<8x128xf32>
    %3 = tpu.matmul %1, %2, %cst {dimension_numbers = #tpu.dot_dimension_numbers<[1], [0], [0], [1], [0, 0, 1, 1], [], []>} : vector<8x32xbf16>, vector<32x128xbf16>, vector<8x128xf32> -> vector<8x128xf32>
    %c0_3 = arith.constant 0 : index
    %c0_4 = arith.constant 0 : index
    %4 = vector.load %arg3[%c0_3, %c0_4] : memref<1x128xf32, #tpu.memory_space<vmem>>, vector<1x128xf32>
    %5 = vector.broadcast %4 : vector<1x128xf32> to vector<8x128xf32>
    %6 = arith.addf %3, %5 : vector<8x128xf32>
    %cst_5 = arith.constant 0.000000e+00 : f32
    %7 = vector.broadcast %cst_5 : f32 to vector<8x128xf32>
    %8 = arith.maximumf %6, %7 : vector<8x128xf32>
    %9 = arith.truncf %8 : vector<8x128xf32> to vector<8x128xbf16>
    %c0_6 = arith.constant 0 : index
    %c0_7 = arith.constant 0 : index
    %10 = vector.load %arg4[%c0_6, %c0_7] : memref<128x128xbf16, #tpu.memory_space<vmem>>, vector<128x128xbf16>
    %cst_8 = arith.constant dense<0.000000e+00> : vector<8x128xf32>
    %11 = tpu.matmul %9, %10, %cst_8 {dimension_numbers = #tpu.dot_dimension_numbers<[1], [0], [0], [1], [0, 0, 1, 1], [], []>} : vector<8x128xbf16>, vector<128x128xbf16>, vector<8x128xf32> -> vector<8x128xf32>
    %c0_9 = arith.constant 0 : index
    %c0_10 = arith.constant 0 : index
    %12 = vector.load %arg5[%c0_9, %c0_10] : memref<1x128xf32, #tpu.memory_space<vmem>>, vector<1x128xf32>
    %13 = vector.broadcast %12 : vector<1x128xf32> to vector<8x128xf32>
    %14 = arith.addf %11, %13 : vector<8x128xf32>
    %cst_11 = arith.constant 0.000000e+00 : f32
    %15 = vector.broadcast %cst_11 : f32 to vector<8x128xf32>
    %16 = arith.maximumf %14, %15 : vector<8x128xf32>
    %c0_12 = arith.constant 0 : index
    %c0_13 = arith.constant 0 : index
    %17 = vector.load %arg6[%c0_12, %c0_13] : memref<8x128xbf16, #tpu.memory_space<vmem>>, vector<8x128xbf16>
    %18 = arith.truncf %16 : vector<8x128xf32> to vector<8x128xbf16>
    %cst_14 = arith.constant dense<0.000000e+00> : vector<8x8xf32>
    %19 = tpu.matmul %17, %18, %cst_14 {dimension_numbers = #tpu.dot_dimension_numbers<[1], [1], [0], [0], [0, 0, 1, 0], [], []>} : vector<8x128xbf16>, vector<8x128xbf16>, vector<8x8xf32> -> vector<8x8xf32>
    %c0_15 = arith.constant 0 : index
    %c0_16 = arith.constant 0 : index
    %20 = vector.load %arg7[%c0_15, %c0_16] : memref<8x1xf32, #tpu.memory_space<vmem>>, vector<8x1xf32>
    %21 = vector.broadcast %20 : vector<8x1xf32> to vector<8x8xf32>
    %22 = arith.addf %19, %21 : vector<8x8xf32>
    %c0_17 = arith.constant 0 : index
    %c0_18 = arith.constant 0 : index
    %23 = vector.load %arg8[%c0_17, %c0_18] : memref<8x8xf32, #tpu.memory_space<vmem>>, vector<8x8xf32>
    tpu.vector_store %arg8[%c0_17, %c0_18], %22 {strides = array<i32>} : memref<8x8xf32, #tpu.memory_space<vmem>>, vector<8x8xf32>,
    return
  }
  func.func @transform_0(%arg0: i32) -> (i32, i32) {
    %c0_i32 = arith.constant 0 : i32
    %c0_i32_0 = arith.constant 0 : i32
    return %arg0, %c0_i32 : i32, i32
  }
  func.func @transform_1(%arg0: i32) -> (i32, i32) {
    %c0_i32 = arith.constant 0 : i32
    %c0_i32_0 = arith.constant 0 : i32
    %c0_i32_1 = arith.constant 0 : i32
    return %c0_i32, %c0_i32_0 : i32, i32
  }
  func.func @transform_2(%arg0: i32) -> (i32, i32) {
    %c0_i32 = arith.constant 0 : i32
    %c0_i32_0 = arith.constant 0 : i32
    %c0_i32_1 = arith.constant 0 : i32
    return %c0_i32, %c0_i32_0 : i32, i32
  }
  func.func @transform_3(%arg0: i32) -> (i32, i32) {
    %c0_i32 = arith.constant 0 : i32
    %c0_i32_0 = arith.constant 0 : i32
    %c0_i32_1 = arith.constant 0 : i32
    return %c0_i32, %c0_i32_0 : i32, i32
  }
  func.func @transform_4(%arg0: i32) -> (i32, i32) {
    %c0_i32 = arith.constant 0 : i32
    %c0_i32_0 = arith.constant 0 : i32
    %c0_i32_1 = arith.constant 0 : i32
    return %c0_i32, %c0_i32_0 : i32, i32
  }
  func.func @transform_5(%arg0: i32) -> (i32, i32) {
    %c0_i32 = arith.constant 0 : i32
    %c0_i32_0 = arith.constant 0 : i32
    %c0_i32_1 = arith.constant 0 : i32
    return %c0_i32, %c0_i32_0 : i32, i32
  }
  func.func @transform_6(%arg0: i32) -> (i32, i32) {
    %c0_i32 = arith.constant 0 : i32
    %c0_i32_0 = arith.constant 0 : i32
    %c0_i32_1 = arith.constant 0 : i32
    return %c0_i32, %c0_i32_0 : i32, i32
  }
  func.func @transform_7(%arg0: i32) -> (i32, i32) {
    %c0_i32 = arith.constant 0 : i32
    %c0_i32_0 = arith.constant 0 : i32
    return %c0_i32, %arg0 : i32, i32
  }
}

</mosaic_0001>

<llo_original>
// kernel: stock_prediction_nn.1
$region0: #{stock_prediction_nn.1}
  #allocation0 [shape = 'u32[]', space=smem, size = 0x4, offset = 0x4, fixed_abs, tag = 'smem constant byte address 0x4 - core index']
  #allocation1 [shape = 'u32[72,128]{1,0:T(1,128)}', space=vmem, size = 0x9000, scoped, tag = 'internal scratch']
  %s0 = inlined_call_operand.vmem [shape: f32[8,32], index: 0, kind: input, shape index: {}]
  %s1 = inlined_call_operand.vmem [shape: bf16[32,128], index: 1, kind: input, shape index: {}]
  %s2 = inlined_call_operand.vmem [shape: f32[1,128], index: 2, kind: input, shape index: {}]
  %s3 = inlined_call_operand.vmem [shape: bf16[128,128], index: 3, kind: input, shape index: {}]
  %s4 = inlined_call_operand.vmem [shape: f32[1,128], index: 4, kind: input, shape index: {}]
  %s5 = inlined_call_operand.vmem [shape: bf16[8,128], index: 5, kind: input, shape index: {}]
  %s6 = inlined_call_operand.vmem [shape: f32[8,1], index: 6, kind: input, shape index: {}]
  %s7 = inlined_call_operand.vmem [shape: f32[8,8], index: 7, kind: output, shape index: {}]
  %s8 = sld [smem:[#allocation0]]
  $region38: #{stock_prediction_nn.1} parent=0
    _
  %s10 = ssub.s32 1, %s8
  %s11 = scalar_select 0, %s10, %s8
  // Predicated region
  $region2: #{stock_prediction_nn.1} parent=0 // pred_check
    _
  $region3: #{stock_prediction_nn.1} parent=0 // pred_check_branch
    %13 = sbr.rel (0) target = $region5
  $region4: #{stock_prediction_nn.1} parent=0 // pred_region
    _
  $region5: #{stock_prediction_nn.1} parent=0 // pred_fallthru
    _
  // Predicated region
  $region6: #{stock_prediction_nn.1} parent=0 // pred_check
    _
  $region7: #{stock_prediction_nn.1} parent=0 // pred_check_branch
    %15 = sbr.rel (0) target = $region9
  $region8: #{stock_prediction_nn.1} parent=0 // pred_region
    _
  $region9: #{stock_prediction_nn.1} parent=0 // pred_fallthru
    _
  // Predicated region
  $region10: #{stock_prediction_nn.1} parent=0 // pred_check
    _
  $region11: #{stock_prediction_nn.1} parent=0 // pred_check_branch
    %17 = sbr.rel (0) target = $region13
  $region12: #{stock_prediction_nn.1} parent=0 // pred_region
    _
  $region13: #{stock_prediction_nn.1} parent=0 // pred_fallthru
    _
  // Predicated region
  $region14: #{stock_prediction_nn.1} parent=0 // pred_check
    _
  $region15: #{stock_prediction_nn.1} parent=0 // pred_check_branch
    %19 = sbr.rel (0) target = $region17
  $region16: #{stock_prediction_nn.1} parent=0 // pred_region
    _
  $region17: #{stock_prediction_nn.1} parent=0 // pred_fallthru
    _
  // Predicated region
  $region18: #{stock_prediction_nn.1} parent=0 // pred_check
    _
  $region19: #{stock_prediction_nn.1} parent=0 // pred_check_branch
    %21 = sbr.rel (0) target = $region21
  $region20: #{stock_prediction_nn.1} parent=0 // pred_region
    _
  $region21: #{stock_prediction_nn.1} parent=0 // pred_fallthru
    _
  // Predicated region
  $region22: #{stock_prediction_nn.1} parent=0 // pred_check
    _
  $region23: #{stock_prediction_nn.1} parent=0 // pred_check_branch
    %23 = sbr.rel (0) target = $region25
  $region24: #{stock_prediction_nn.1} parent=0 // pred_region
    _
  $region25: #{stock_prediction_nn.1} parent=0 // pred_fallthru
    _
  // Predicated region
  $region26: #{stock_prediction_nn.1} parent=0 // pred_check
    _
  $region27: #{stock_prediction_nn.1} parent=0 // pred_check_branch
    %25 = sbr.rel (0) target = $region29
  $region28: #{stock_prediction_nn.1} parent=0 // pred_region
    _
  $region29: #{stock_prediction_nn.1} parent=0 // pred_fallthru
    _
  %v27 = vld [vmem:[%s0] sm:$0xff]
  %v28 = vpack.c.bf16 %v27, %v27
  %v29 = vld [vmem:[%s1] sm:$0xf]
  %v30 = vld [vmem:[%s1 + $0x4] sm:$0xf]
  %v31 = vld [vmem:[%s1 + $0x8] sm:$0xf]
  %v32 = vld [vmem:[%s1 + $0xc] sm:$0xf]
  %v33 = vld [vmem:[%s2] sm:$0x1]
  %v35 = vperm.slane %v33, 0
  %v41 = vunpack.c.l.b16 %v29
  %v42 = vunpack.c.l.b16 %v30
  %v43 = vunpack.c.l.b16 %v31
  %v44 = vunpack.c.l.b16 %v32
  %v45 = vpack.c.b16 %v42, %v41
  %v46 = vpack.c.b16 %v44, %v43
  %vm49 = vcmask 261120
  %v51 = vsel %vm49, %v28, 0
  %53 = vmatpush.bf16.msra.mxu0 0
  %54 = vmatpush.bf16.msra.mxu0 0
  %55 = vmatpush.bf16.msra.mxu0 0
  %56 = vmatpush.bf16.msra.mxu0 0
  %57 = vmatpush.bf16.msra.mxu0 0
  %58 = vmatpush.bf16.msra.mxu0 0
  %59 = vmatpush.bf16.msra.mxu0 %v46
  %60 = vmatpush.bf16.msra.mxu0 %v45
  %61 = vmatmul.bf16.gmra.mxu0 %v51
  %v62 = vpop.f32.mrf.mxu0
  %v63 = vadd.f32 %v35, %v62
  %v64 = vpop.f32.mrf.mxu0
  %65 = vdwg.mxu0
  %v66 = vmax.f32 %v63, 0.0
  %v67 = vpack.c.bf16 %v66, %v66
  %v68 = vld [vmem:[%s3] sm:$0xf]
  %v69 = vld [vmem:[%s3 + $0x4] sm:$0xf]
  %v70 = vld [vmem:[%s3 + $0x8] sm:$0xf]
  %v71 = vld [vmem:[%s3 + $0xc] sm:$0xf]
  %v72 = vld [vmem:[%s3 + $0x10] sm:$0xf]
  %v73 = vld [vmem:[%s3 + $0x14] sm:$0xf]
  %v74 = vld [vmem:[%s3 + $0x18] sm:$0xf]
  %v75 = vld [vmem:[%s3 + $0x1c] sm:$0xf]
  %v76 = vld [vmem:[%s3 + $0x20] sm:$0xf]
  %v77 = vld [vmem:[%s3 + $0x24] sm:$0xf]
  %v78 = vld [vmem:[%s3 + $0x28] sm:$0xf]
  %v79 = vld [vmem:[%s3 + $0x2c] sm:$0xf]
  %v80 = vld [vmem:[%s3 + $0x30] sm:$0xf]
  %v81 = vld [vmem:[%s3 + $0x34] sm:$0xf]
  %v82 = vld [vmem:[%s3 + $0x38] sm:$0xf]
  %v83 = vld [vmem:[%s3 + $0x3c] sm:$0xf]
  %v84 = vld [vmem:[%s4] sm:$0x1]
  %v86 = vperm.slane %v84, 0
  %v104 = vunpack.c.l.b16 %v68
  %v105 = vunpack.c.l.b16 %v69
  %v106 = vunpack.c.l.b16 %v70
  %v107 = vunpack.c.l.b16 %v71
  %v108 = vunpack.c.l.b16 %v72
  %v109 = vunpack.c.l.b16 %v73
  %v110 = vunpack.c.l.b16 %v74
  %v111 = vunpack.c.l.b16 %v75
  %v112 = vunpack.c.l.b16 %v76
  %v113 = vunpack.c.l.b16 %v77
  %v114 = vunpack.c.l.b16 %v78
  %v115 = vunpack.c.l.b16 %v79
  %v116 = vunpack.c.l.b16 %v80
  %v117 = vunpack.c.l.b16 %v81
  %v118 = vunpack.c.l.b16 %v82
  %v119 = vunpack.c.l.b16 %v83
  %v120 = vpack.c.b16 %v105, %v104
  %v121 = vpack.c.b16 %v107, %v106
  %v122 = vpack.c.b16 %v109, %v108
  %v123 = vpack.c.b16 %v111, %v110
  %v124 = vpack.c.b16 %v113, %v112
  %v125 = vpack.c.b16 %v115, %v114
  %v126 = vpack.c.b16 %v117, %v116
  %v127 = vpack.c.b16 %v119, %v118
  %136 = vmatpush.bf16.msra.mxu0 %v127
  %137 = vmatpush.bf16.msra.mxu0 %v126
  %138 = vmatpush.bf16.msra.mxu0 %v125
  %139 = vmatpush.bf16.msra.mxu0 %v124
  %140 = vmatpush.bf16.msra.mxu0 %v123
  %141 = vmatpush.bf16.msra.mxu0 %v122
  %142 = vmatpush.bf16.msra.mxu0 %v121
  %143 = vmatpush.bf16.msra.mxu0 %v120
  %144 = vmatmul.bf16.gmra.mxu0 %v67
  %v145 = vpop.f32.mrf.mxu0
  %v146 = vadd.f32 %v86, %v145
  %v147 = vpop.f32.mrf.mxu0
  %148 = vdwg.mxu0
  %v149 = vmax.f32 %v146, 0.0
  %v150 = vld [vmem:[%s5] sm:$0xf]
  %v151 = vpack.c.bf16 %v149, %v149
  %v152 = vld [vmem:[%s6] sm:$0xff]
  %154 = vset.pattern.permute.xlu0 0
  %155 = vperm.xlu0 %154, %v152
  %v156 = vpop.permute.xlu0 %155
  %158 = vmatpush.bf16.xpose.msra.mxu0 0
  %159 = vmatpush.bf16.xpose.msra.mxu0 0
  %160 = vmatpush.bf16.xpose.msra.mxu0 0
  %161 = vmatpush.bf16.xpose.msra.mxu0 0
  %162 = vmatpush.bf16.xpose.msra.mxu0 0
  %163 = vmatpush.bf16.xpose.msra.mxu0 0
  %164 = vmatpush.bf16.xpose.msra.mxu0 0
  %165 = vmatpush.bf16.xpose.msra.mxu0 %v151
  %166 = vmatmul.bf16.gmra.mxu0 %v150
  %v167 = vpop.f32.mrf.mxu0
  %v168 = vadd.f32 %v156, %v167
  %v169 = vpop.f32.mrf.mxu0
  %170 = vdwg.mxu0
  %vm171 = vcmask 64512
  %172 = vst.msk [vmem:[%s7] sm:$0xff] %vm171, %v168
  // Predicated region
  $region30: #{stock_prediction_nn.1} parent=0 // pred_check
    _
  $region31: #{stock_prediction_nn.1} parent=0 // pred_check_branch
    %174 = sbr.rel (0) target = $region33
  $region32: #{stock_prediction_nn.1} parent=0 // pred_region
    _
  $region33: #{stock_prediction_nn.1} parent=0 // pred_fallthru
    _
  // Predicated region
  $region34: #{stock_prediction_nn.1} parent=0 // pred_check
    _
  $region35: #{stock_prediction_nn.1} parent=0 // pred_check_branch
    %176 = sbr.rel (0) target = $region37
  $region36: #{stock_prediction_nn.1} parent=0 // pred_region
    _
  $region37: #{stock_prediction_nn.1} parent=0 // pred_fallthru
    _

</llo_original>
